<compile_context>
chip_gen: v6e
topology: v6e:2x2x1
jax: 0.10.0
libtpu: 0.0.40
codegen_flags: <defaults>
</compile_context>

<pallas_src>
import math
import functools

import jax
import jax.numpy as jnp
from jax.experimental import pallas as pl
from jax.experimental.pallas import tpu as pltpu


# ---------------------------------------------------------------------------
# hardware-aware helpers
# ---------------------------------------------------------------------------
def _vmem_caps():
    """(per-step working-set budget, vmem_limit_bytes) from physical VMEM
    (128 MiB on v5e/v6e, 64 MiB per TC on v7x). Conservative fallback: 64 MiB."""
    cap = 64 * 1024 * 1024
    try:
        info = pltpu.get_tpu_info()
        cap = int(getattr(info, "vmem_capacity_bytes", cap))
    except Exception:
        pass
    budget = max(8 << 20, min(cap // 3, 32 << 20))
    limit = max(2 * budget, min(int(cap * 0.8), 96 << 20))
    return budget, limit


def _num_tensorcores():
    """2 TensorCores per chip on v7x, 1 on v5e/v6e (best effort)."""
    try:
        kind = jax.devices()[0].device_kind.lower()
        if "v7" in kind:
            return 2
    except Exception:
        pass
    return 1


def _pick_tile(dim, target, align):
    """Largest `align`-multiple divisor of `dim` that is <= target, else the full dim."""
    if dim <= target:
        return dim
    t = (target // align) * align
    while t >= align:
        if dim % t == 0:
            return t
        t -= align
    return dim


def _choose_attn_tiles(B, Lq, Lk, Lv, n_head, d_k, d_v, with_probs,
                       in_b, out_b, prob_b, budget, num_cores):
    """(batch block, Lq block) for the non-fused attention kernel."""
    def fp(bb, tq):
        f = in_b * bb * (tq * n_head * d_k + Lk * n_head * d_k + Lv * n_head * d_v)
        f += out_b * bb * tq * n_head * d_v
        if with_probs:
            f += 3 * prob_b * n_head * bb * tq * Lk
        return 2 * f  # double-buffered pipeline

    tq_cands = [Lq] + sorted([t for t in range(8, Lq) if Lq % t == 0 and t % 8 == 0],
                             reverse=True)
    bb_cands = sorted([d for d in range(1, B + 1) if B % d == 0], reverse=True)
    bb, tq = 1, tq_cands[-1]
    done = False
    for t in tq_cands:
        for b in bb_cands:
            if fp(b, t) <= budget:
                bb, tq = b, t
                done = True
                break
        if done:
            break
    # only pay extra grid-step overhead for parallelism on multi-TC chips
    if num_cores >= 2 and (B // bb) * (Lq // tq) < 2 and B >= 2:
        for cand in range(bb - 1, 0, -1):
            if B % cand == 0:
                bb = cand
                break
    return bb, tq


def _choose_fused_bb(B, L, n_head, d_k, d_v, with_probs, in_b, out_b, prob_b,
                     budget, num_cores):
    """Batch block for the fused-QKV attention kernel; None if even bb=1 won't fit."""
    nqk, nhv = n_head * d_k, n_head * d_v

    def fp(bb):
        f = in_b * bb * L * (2 * nqk + nhv) + out_b * bb * L * nhv
        if with_probs:
            f += 3 * prob_b * n_head * bb * L * L
        return 2 * f

    bb = None
    for cand in sorted([d for d in range(1, B + 1) if B % d == 0], reverse=True):
        if fp(cand) <= budget:
            bb = cand
            break
    if bb is None:
        return None
    if num_cores >= 2 and B // bb < 2 and B >= 2:
        for cand in range(bb - 1, 0, -1):
            if B % cand == 0:
                bb = cand
                break
    return bb


# ---------------------------------------------------------------------------
# Kernel 1: tiled matmul (no bias) — (fused) Q/K/V projections
# ---------------------------------------------------------------------------
def _matmul_kernel(x_ref, w_ref, o_ref, acc_ref):
    @pl.when(pl.program_id(2) == 0)
    def _():
        acc_ref[...] = jnp.zeros_like(acc_ref)

    a = x_ref[...]
    b = w_ref[...]
    if a.dtype != b.dtype:          # cast activation tile in-VMEM (no HBM cast pass)
        a = a.astype(b.dtype)
    acc_ref[...] += jnp.dot(a, b, preferred_element_type=jnp.float32)

    @pl.when(pl.program_id(2) == pl.num_programs(2) - 1)
    def _():
        o_ref[...] = acc_ref[...].astype(o_ref.dtype)


def pallas_matmul(x, w_t, *, out_dtype=None, tm=256, tn=256, tk=1024, vmem_limit=None):
    """x: (M, K), w_t: (K, N) -> (M, N) in out_dtype, f32 accumulation."""
    M, K = x.shape
    K2, N = w_t.shape
    assert K == K2
    out_dtype = out_dtype or x.dtype
    tm = _pick_tile(M, tm, 8)
    tn = _pick_tile(N, tn, 128)
    tk = _pick_tile(K, tk, 128)
    grid = (M // tm, N // tn, K // tk)
    return pl.pallas_call(
        _matmul_kernel,
        out_shape=jax.ShapeDtypeStruct((M, N), out_dtype),
        grid=grid,
        in_specs=[
            pl.BlockSpec((tm, tk), lambda i, j, k: (i, k)),
            pl.BlockSpec((tk, tn), lambda i, j, k: (k, j)),
        ],
        out_specs=pl.BlockSpec((tm, tn), lambda i, j, k: (i, j)),
        scratch_shapes=[pltpu.VMEM((tm, tn), jnp.float32)],
        compiler_params=pltpu.CompilerParams(
            dimension_semantics=("parallel", "parallel", "arbitrary"),
            vmem_limit_bytes=vmem_limit),
    )(x, w_t)


# ---------------------------------------------------------------------------
# Kernel 2: scaled dot-product attention
#   - per-head ref slices, direct per-head stores into the merged-head output
#   - optional fused-QKV input (Q/K/V column ranges sliced in-kernel)
#   - probes attn / log_attn / raw_attn in head-major layout (optional, bf16 default)
# ---------------------------------------------------------------------------
def _make_attn_kernel(n_head, d_k, d_v, temperature, with_probs, fused):
    inv_temp = 1.0 / float(temperature)
    nqk = n_head * d_k

    def body(get_qh, get_kh, get_vh, o_ref, prob_refs):
        if with_probs:
            attn_ref, logattn_ref, raw_ref = prob_refs
        for h in range(n_head):
            qh = get_qh(h)                       # (bb, tq, d_k)
            kh = get_kh(h)                       # (bb, Lk, d_k)
            vh = get_vh(h)                       # (bb, Lv, d_v)
            s = jnp.einsum('bqd,bkd->bqk', qh, kh,
                           preferred_element_type=jnp.float32) * inv_temp
            m = jnp.max(s, axis=-1, keepdims=True)
            e = jnp.exp(s - m)
            denom = jnp.sum(e, axis=-1, keepdims=True)
            p = e * pl.reciprocal(denom, approx=True)   # EUP vrcp path
            if with_probs:
                raw_ref[h] = s.astype(raw_ref.dtype)
                attn_ref[h] = p.astype(attn_ref.dtype)
                logattn_ref[h] = ((s - m) - jnp.log(denom)).astype(logattn_ref.dtype)
            # dropout(attn) is identity in eval mode; bf16 probs feed the MXU PV matmul
            pv = jnp.einsum('bqk,bkd->bqd', p.astype(vh.dtype), vh,
                            preferred_element_type=jnp.float32)
            o_ref[:, :, h * d_v:(h + 1) * d_v] = pv.astype(o_ref.dtype)

    if fused:
        def kernel(qkv_ref, o_ref, *prob_refs):
            body(lambda h: qkv_ref[:, :, h * d_k:(h + 1) * d_k],
                 lambda h: qkv_ref[:, :, nqk + h * d_k: nqk + (h + 1) * d_k],
                 lambda h: qkv_ref[:, :, 2 * nqk + h * d_v: 2 * nqk + (h + 1) * d_v],
                 o_ref, prob_refs)
    else:
        def kernel(q_ref, k_ref, v_ref, o_ref, *prob_refs):
            body(lambda h: q_ref[:, :, h * d_k:(h + 1) * d_k],
                 lambda h: k_ref[:, :, h * d_k:(h + 1) * d_k],
                 lambda h: v_ref[:, :, h * d_v:(h + 1) * d_v],
                 o_ref, prob_refs)
    return kernel


def pallas_attention(q, k, v, n_head, d_k, d_v, temperature, *,
                     with_probs, out_dtype, probs_dtype, budget, vmem_limit, num_cores):
    """Non-fused path: q (B,Lq,H*d_k), k (B,Lk,H*d_k), v (B,Lv,H*d_v).
    Grid over (batch blocks, Lq blocks). Probes are (H,B,Lq,Lk) head-major."""
    B, Lq, _ = q.shape
    _, Lk, _ = k.shape
    _, Lv, _ = v.shape
    in_b = jnp.dtype(q.dtype).itemsize
    out_b = jnp.dtype(out_dtype).itemsize
    prob_b = jnp.dtype(probs_dtype).itemsize
    bb, tq = _choose_attn_tiles(B, Lq, Lk, Lv, n_head, d_k, d_v, with_probs,
                                in_b, out_b, prob_b, budget, num_cores)
    grid = (B // bb, Lq // tq)

    kern = _make_attn_kernel(n_head, d_k, d_v, temperature, with_probs, fused=False)
    in_specs = [
        pl.BlockSpec((bb, tq, n_head * d_k), lambda i, j: (i, j, 0)),
        pl.BlockSpec((bb, Lk, n_head * d_k), lambda i, j: (i, 0, 0)),
        pl.BlockSpec((bb, Lv, n_head * d_v), lambda i, j: (i, 0, 0)),
    ]
    out_shapes = [jax.ShapeDtypeStruct((B, Lq, n_head * d_v), out_dtype)]
    out_specs = [pl.BlockSpec((bb, tq, n_head * d_v), lambda i, j: (i, j, 0))]
    if with_probs:
        ps = jax.ShapeDtypeStruct((n_head, B, Lq, Lk), probs_dtype)
        psp = pl.BlockSpec((n_head, bb, tq, Lk), lambda i, j: (0, i, j, 0))
        out_shapes += [ps, ps, ps]
        out_specs += [psp, psp, psp]

    outs = pl.pallas_call(
        kern,
        out_shape=tuple(out_shapes),
        grid=grid,
        in_specs=in_specs,
        out_specs=tuple(out_specs),
        compiler_params=pltpu.CompilerParams(
            dimension_semantics=("parallel", "parallel"),
            vmem_limit_bytes=vmem_limit),
    )(q, k, v)
    if with_probs:
        return outs
    return outs[0], None, None, None


def pallas_attention_fused(qkv, n_head, d_k, d_v, temperature, *, bb,
                           with_probs, out_dtype, probs_dtype, vmem_limit):
    """Fused path (self-attention, d_k == d_v): qkv is (B, L, 2*H*d_k + H*d_v);
    Q/K/V column ranges are sliced inside the kernel (no XLA slice copies)."""
    B, L, W = qkv.shape
    grid = (B // bb,)
    kern = _make_attn_kernel(n_head, d_k, d_v, temperature, with_probs, fused=True)
    in_specs = [pl.BlockSpec((bb, L, W), lambda i: (i, 0, 0))]
    out_shapes = [jax.ShapeDtypeStruct((B, L, n_head * d_v), out_dtype)]
    out_specs = [pl.BlockSpec((bb, L, n_head * d_v), lambda i: (i, 0, 0))]
    if with_probs:
        ps = jax.ShapeDtypeStruct((n_head, B, L, L), probs_dtype)
        psp = pl.BlockSpec((n_head, bb, L, L), lambda i: (0, i, 0, 0))
        out_shapes += [ps, ps, ps]
        out_specs += [psp, psp, psp]

    outs = pl.pallas_call(
        kern,
        out_shape=tuple(out_shapes),
        grid=grid,
        in_specs=in_specs,
        out_specs=tuple(out_specs),
        compiler_params=pltpu.CompilerParams(
            dimension_semantics=("parallel",),
            vmem_limit_bytes=vmem_limit),
    )(qkv)
    if with_probs:
        return outs
    return outs[0], None, None, None


# ---------------------------------------------------------------------------
# Kernel 3: fc (bias) + residual + LayerNorm, row-tiled with K-reduction axis
#   resout = x @ W_fc^T + b_fc
#   output = LayerNorm(dropout(resout) + residual)   (dropout = identity in eval)
# ---------------------------------------------------------------------------
def _fc_ln_kernel(x_ref, w_ref, b_ref, res_ref, g_ref, beta_ref,
                  out_ref, resout_ref, acc_ref, *, eps):
    @pl.when(pl.program_id(1) == 0)
    def _():
        acc_ref[...] = jnp.zeros_like(acc_ref)

    acc_ref[...] += jnp.dot(x_ref[...], w_ref[...],
                            preferred_element_type=jnp.float32)

    @pl.when(pl.program_id(1) == pl.num_programs(1) - 1)
    def _():
        y = acc_ref[...] + b_ref[...]
        resout_ref[...] = y.astype(resout_ref.dtype)
        z = y + res_ref[...].astype(jnp.float32)
        mean = jnp.mean(z, axis=-1, keepdims=True)
        zc = z - mean
        var = jnp.mean(zc * zc, axis=-1, keepdims=True)
        out_ref[...] = (zc * jax.lax.rsqrt(var + eps) * g_ref[...]
                        + beta_ref[...]).astype(out_ref.dtype)


def pallas_fc_layernorm(x, w_t, b, residual, gamma, beta, *, eps=1e-5,
                        tm=256, tk=1024, vmem_limit=None):
    """x: (M, Kin), w_t: (Kin, D), b/gamma/beta: (1, D), residual: (M, D) f32."""
    M, Kin = x.shape
    _, D = w_t.shape
    tm = _pick_tile(M, tm, 8)
    tkk = _pick_tile(Kin, tk, 128)
    grid = (M // tm, Kin // tkk)
    kern = functools.partial(_fc_ln_kernel, eps=eps)
    return pl.pallas_call(
        kern,
        out_shape=(jax.ShapeDtypeStruct((M, D), jnp.float32),   # normed output
                   jax.ShapeDtypeStruct((M, D), jnp.float32)),  # resout
        grid=grid,
        in_specs=[
            pl.BlockSpec((tm, tkk), lambda i, kk: (i, kk)),
            pl.BlockSpec((tkk, D), lambda i, kk: (kk, 0)),
            pl.BlockSpec((1, D), lambda i, kk: (0, 0)),
            pl.BlockSpec((tm, D), lambda i, kk: (i, 0)),
            pl.BlockSpec((1, D), lambda i, kk: (0, 0)),
            pl.BlockSpec((1, D), lambda i, kk: (0, 0)),
        ],
        out_specs=(pl.BlockSpec((tm, D), lambda i, kk: (i, 0)),
                   pl.BlockSpec((tm, D), lambda i, kk: (i, 0))),
        scratch_shapes=[pltpu.VMEM((tm, D), jnp.float32)],
        compiler_params=pltpu.CompilerParams(
            dimension_semantics=("parallel", "arbitrary"),
            vmem_limit_bytes=vmem_limit),
    )(x, w_t, b, residual, gamma, beta)


# ---------------------------------------------------------------------------
# MultiHeadAttention forward (glue in plain JAX, hot paths in Pallas kernels)
# ---------------------------------------------------------------------------
class MultiHeadAttentionPallas:
    def __init__(self, n_head, d_model, d_k, d_v, key, *, flag_norm=True,
                 compute_dtype=jnp.bfloat16, probs_dtype=jnp.bfloat16):
        self.n_head, self.d_model, self.d_k, self.d_v = n_head, d_model, d_k, d_v
        self.temperature = math.sqrt(d_k)
        self.flag_norm = flag_norm
        self.compute_dtype = compute_dtype    # bf16 operands, f32 accumulation
        self.probs_dtype = probs_dtype        # diagnostics; bf16 halves probe HBM writes
        self.vmem_budget, self.vmem_limit = _vmem_caps()
        self.num_cores = _num_tensorcores()

        k0, k1, k2, k3, k4 = jax.random.split(key, 5)
        std_qk = math.sqrt(2.0 / (d_model + d_k))
        std_v = math.sqrt(2.0 / (d_model + d_v))
        # PyTorch Linear weight layout: (out, in). Keep f32 masters, store transposed.
        self.w_qs_t_f32 = (jax.random.normal(k0, (n_head * d_k, d_model)) * std_qk).T.astype(jnp.float32)
        self.w_ks_t_f32 = (jax.random.normal(k1, (n_head * d_k, d_model)) * std_qk).T.astype(jnp.float32)
        self.w_vs_t_f32 = (jax.random.normal(k2, (n_head * d_v, d_model)) * std_v).T.astype(jnp.float32)
        fan_in, fan_out = n_head * d_v, d_model
        std_fc = math.sqrt(2.0 / (fan_in + fan_out))          # xavier_normal_
        self.w_fc_t_f32 = (jax.random.normal(k3, (fan_out, fan_in)) * std_fc).T.astype(jnp.float32)
        bound = 1.0 / math.sqrt(fan_in)
        self.b_fc = jax.random.uniform(k4, (1, d_model), minval=-bound, maxval=bound).astype(jnp.float32)
        # LayerNorm parameters (nn.LayerNorm init: weight=1, bias=0, eps=1e-5)
        self.ln_gamma = jnp.ones((1, d_model), jnp.float32)
        self.ln_beta = jnp.zeros((1, d_model), jnp.float32)

        # compute-dtype weight copies made ONCE here (not per forward)
        cd = compute_dtype
        self.w_qs_t = self.w_qs_t_f32.astype(cd)
        self.w_ks_t = self.w_ks_t_f32.astype(cd)
        self.w_vs_t = self.w_vs_t_f32.astype(cd)
        self.w_qkv_t = jnp.concatenate(
            [self.w_qs_t_f32, self.w_ks_t_f32, self.w_vs_t_f32], axis=1).astype(cd)
        self.w_fc_t = self.w_fc_t_f32.astype(cd)

    def __call__(self, q, k, v, with_probs=True):
        n_head, d_k, d_v, d_model = self.n_head, self.d_k, self.d_v, self.d_model
        B, Lq, _ = q.shape
        B2, Lk, _ = k.shape
        _, Lv, _ = v.shape
        assert B == B2
        residual = q
        cd = self.compute_dtype
        nqk, nhv = n_head * d_k, n_head * d_v
        in_b = jnp.dtype(cd).itemsize
        prob_b = jnp.dtype(self.probs_dtype).itemsize

        self_attn = (q is k) and (k is v) and (d_k == d_v)
        bb_fused = None
        if self_attn:
            bb_fused = _choose_fused_bb(B, Lq, n_head, d_k, d_v, with_probs,
                                        in_b, in_b, prob_b,
                                        self.vmem_budget, self.num_cores)

        q2d = q.reshape(B * Lq, d_model)
        if bb_fused is not None:
            # one fused QKV projection; Q/K/V column split happens inside the attention kernel
            qkv = pallas_matmul(q2d, self.w_qkv_t, out_dtype=cd,
                                vmem_limit=self.vmem_limit)
            qkv = qkv.reshape(B, Lq, 2 * nqk + nhv)
            out_m, attn4, logattn4, raw4 = pallas_attention_fused(
                qkv, n_head, d_k, d_v, self.temperature, bb=bb_fused,
                with_probs=with_probs, out_dtype=cd, probs_dtype=self.probs_dtype,
                vmem_limit=self.vmem_limit)
        else:
            k2d = k.reshape(B * Lk, d_model)
            v2d = v.reshape(B * Lv, d_model)
            qp = pallas_matmul(q2d, self.w_qs_t, out_dtype=cd,
                               vmem_limit=self.vmem_limit).reshape(B, Lq, nqk)
            kp = pallas_matmul(k2d, self.w_ks_t, out_dtype=cd,
                               vmem_limit=self.vmem_limit).reshape(B, Lk, nqk)
            vp = pallas_matmul(v2d, self.w_vs_t, out_dtype=cd,
                               vmem_limit=self.vmem_limit).reshape(B, Lv, nhv)
            out_m, attn4, logattn4, raw4 = pallas_attention(
                qp, kp, vp, n_head, d_k, d_v, self.temperature,
                with_probs=with_probs, out_dtype=cd, probs_dtype=self.probs_dtype,
                budget=self.vmem_budget, vmem_limit=self.vmem_limit,
                num_cores=self.num_cores)

        # fc + residual + LayerNorm (fused, row-tiled, K-reduction axis)
        out2d = out_m.reshape(B * Lq, nhv)
        ln2d, resout2d = pallas_fc_layernorm(
            out2d, self.w_fc_t, self.b_fc,
            residual.reshape(B * Lq, d_model).astype(jnp.float32),
            self.ln_gamma, self.ln_beta, vmem_limit=self.vmem_limit)
        resout = resout2d.reshape(B, Lq, d_model)
        output = (ln2d if self.flag_norm else resout2d).reshape(B, Lq, d_model)

        if with_probs:
            attn = attn4.reshape(n_head * B, Lq, Lk)        # head-major, free reshape
            log_attn = logattn4.reshape(n_head * B, Lq, Lk)
            raw_attn = raw4.reshape(n_head * B, Lq, Lk)
        else:
            attn = log_attn = raw_attn = None
        return output, resout, attn, log_attn, raw_attn


# ---------------------------------------------------------------------------
# pure-JAX reference (mirrors the PyTorch forward, eval mode) + demo
# ---------------------------------------------------------------------------
def reference_forward(mha, q, k, v):
    H, dk, dv = mha.n_head, mha.d_k, mha.d_v
    B, Lq, _ = q.shape
    Lk = k.shape[1]
    qp = q @ mha.w_qs_t_f32
    kp = k @ mha.w_ks_t_f32
    vp = v @ mha.w_vs_t_f32
    qh = qp.reshape(B, Lq, H, dk).transpose(2, 0, 1, 3).reshape(H * B, Lq, dk)
    kh = kp.reshape(B, Lk, H, dk).transpose(2, 0, 1, 3).reshape(H * B, Lk, dk)
    vh = vp.reshape(B, Lk, H, dv).transpose(2, 0, 1, 3).reshape(H * B, Lk, dv)
    raw = jnp.einsum('bqd,bkd->bqk', qh, kh) / mha.temperature
    attn = jax.nn.softmax(raw, axis=-1)
    log_attn = jax.nn.log_softmax(raw, axis=-1)
    o = jnp.einsum('bqk,bkd->bqd', attn, vh)
    o = o.reshape(H, B, Lq, dv).transpose(1, 2, 0, 3).reshape(B, Lq, H * dv)
    resout = o @ mha.w_fc_t_f32 + mha.b_fc
    z = resout + q
    mean = z.mean(-1, keepdims=True)
    var = ((z - mean) ** 2).mean(-1, keepdims=True)
    out = (z - mean) / jnp.sqrt(var + 1e-5) * mha.ln_gamma + mha.ln_beta
    out = out if mha.flag_norm else resout
    return out, resout, attn, log_attn, raw


def _maxdiff(a, b):
    return float(jnp.max(jnp.abs(jnp.asarray(a, jnp.float32) - jnp.asarray(b, jnp.float32))))


if __name__ == "__main__":
    # Small shapes consistent with the module: batch=2, seq=8, d_model=32, n_head=4, d_k=d_v=8
    batch, seq, d_model = 2, 8, 32
    n_head, d_k, d_v = 4, 8, 8

    key = jax.random.PRNGKey(0)
    k_params, k_q, k_k, k_v = jax.random.split(key, 4)

    q = jax.random.normal(k_q, (batch, seq, d_model), dtype=jnp.float32)
    k = jax.random.normal(k_k, (batch, seq, d_model), dtype=jnp.float32)
    v = jax.random.normal(k_v, (batch, seq, d_model), dtype=jnp.float32)

    # --- f32 instance: verify numerics against the pure-JAX reference ---------------
    mha32 = MultiHeadAttentionPallas(n_head, d_model, d_k, d_v, k_params,
                                     compute_dtype=jnp.float32,
                                     probs_dtype=jnp.float32)
    out, res, attn, log_attn, raw = mha32(q, k, v)          # cross-attn (Lq-tiled path)
    jax.block_until_ready((out, res, attn, log_attn, raw))
    r_out, r_res, r_attn, r_log, r_raw = reference_forward(mha32, q, k, v)
    assert out.shape == (batch, seq, d_model)
    assert res.shape == (batch, seq, d_model)
    assert attn.shape == (n_head * batch, seq, seq)
    assert log_attn.shape == (n_head * batch, seq, seq)
    assert raw.shape == (n_head * batch, seq, seq)
    assert _maxdiff(raw, r_raw) < 2e-3
    assert _maxdiff(log_attn, r_log) < 2e-3
    assert _maxdiff(attn, r_attn) < 2e-2      # approx reciprocal on the softmax denom
    assert _maxdiff(out, r_out) < 2e-2
    assert _maxdiff(res, r_res) < 2e-2

    out_s, res_s, attn_s, _, _ = mha32(q, q, q)             # fused-QKV self-attn path
    jax.block_until_ready((out_s, res_s))
    r_out_s, r_res_s, r_attn_s, _, _ = reference_forward(mha32, q, q, q)
    assert _maxdiff(out_s, r_out_s) < 2e-2
    assert _maxdiff(res_s, r_res_s) < 2e-2
    assert _maxdiff(attn_s, r_attn_s) < 2e-2

    # --- default bf16 instance (MXU-rate path) ---------------------------------------
    mha = MultiHeadAttentionPallas(n_head, d_model, d_k, d_v, k_params)
    out_b, res_b, attn_b, log_b, raw_b = mha(q, q, q, with_probs=False)
    jax.block_until_ready((out_b, res_b))
    assert out_b.shape == (batch, seq, d_model)
    assert res_b.shape == (batch, seq, d_model)
    assert attn_b is None and log_b is None and raw_b is None
    # non-fused path on numerically identical (but distinct) arrays must agree
    out_b2, res_b2, *_ = mha(q, q + 0.0, q + 0.0)
    jax.block_until_ready((out_b2, res_b2))
    assert _maxdiff(out_b, out_b2) < 2e-2
    assert _maxdiff(res_b, res_b2) < 2e-2
    # loose sanity vs the f32 reference (bf16 operands, f32 accumulation)
    assert _maxdiff(out_b, r_out_s) < 0.25
    assert _maxdiff(res_b, r_res_s) < 0.25

    print("KERNEL_OK")
</pallas_src>

<mosaic_0001>
module attributes {stable_mosaic.version = 11 : i64} {
  func.func @_matmul_kernel(%arg0: i32, %arg1: i32, %arg2: i32, %arg3: memref<16x32xf32, #tpu.memory_space<vmem>>, %arg4: memref<32x32xf32, #tpu.memory_space<vmem>>, %arg5: memref<16x32xf32, #tpu.memory_space<vmem>>, %arg6: memref<16x32xf32, #tpu.memory_space<vmem>>) attributes {dimension_semantics = [#tpu.dimension_semantics<parallel>, #tpu.dimension_semantics<parallel>, #tpu.dimension_semantics<arbitrary>], iteration_bounds = array<i64: 1, 1, 1>, scalar_prefetch = 0 : i64, scratch_operands = 1 : i64, tpu.core_type = #tpu.core_type<tc>, window_params = [{transform_indices = @transform_0, window_bounds = array<i64: 16, 32>}, {transform_indices = @transform_1, window_bounds = array<i64: 32, 32>}, {transform_indices = @transform_2, window_bounds = array<i64: 16, 32>}]} {
    %c0_i32 = arith.constant 0 : i32
    %0 = arith.cmpi eq, %arg2, %c0_i32 : i32
    %1 = arith.extui %0 : i1 to i32
    %c0_i32_0 = arith.constant 0 : i32
    %2 = arith.cmpi ne, %1, %c0_i32_0 : i32
    scf.if %2 {
      %cst_10 = arith.constant 0.000000e+00 : f32
      %12 = vector.broadcast %cst_10 : f32 to vector<16x32xf32>
      %c0_11 = arith.constant 0 : index
      %c0_12 = arith.constant 0 : index
      %13 = vector.load %arg6[%c0_11, %c0_12] : memref<16x32xf32, #tpu.memory_space<vmem>>, vector<16x32xf32>
      tpu.vector_store %arg6[%c0_11, %c0_12], %12 {strides = array<i32>} : memref<16x32xf32, #tpu.memory_space<vmem>>, vector<16x32xf32>,
    } else {
    }
    %c0 = arith.constant 0 : index
    %c0_1 = arith.constant 0 : index
    %3 = vector.load %arg3[%c0, %c0_1] : memref<16x32xf32, #tpu.memory_space<vmem>>, vector<16x32xf32>
    %c0_2 = arith.constant 0 : index
    %c0_3 = arith.constant 0 : index
    %4 = vector.load %arg4[%c0_2, %c0_3] : memref<32x32xf32, #tpu.memory_space<vmem>>, vector<32x32xf32>
    %c0_4 = arith.constant 0 : index
    %c0_5 = arith.constant 0 : index
    %5 = vector.load %arg6[%c0_4, %c0_5] : memref<16x32xf32, #tpu.memory_space<vmem>>, vector<16x32xf32>
    %cst = arith.constant dense<0.000000e+00> : vector<16x32xf32>
    %6 = tpu.matmul %3, %4, %cst {dimension_numbers = #tpu.dot_dimension_numbers<[1], [0], [0], [1], [0, 0, 1, 1], [], []>} : vector<16x32xf32>, vector<32x32xf32>, vector<16x32xf32> -> vector<16x32xf32>
    %7 = arith.addf %5, %6 : vector<16x32xf32>
    %c0_6 = arith.constant 0 : index
    %c0_7 = arith.constant 0 : index
    %8 = vector.load %arg6[%c0_6, %c0_7] : memref<16x32xf32, #tpu.memory_space<vmem>>, vector<16x32xf32>
    tpu.vector_store %arg6[%c0_6, %c0_7], %7 {strides = array<i32>} : memref<16x32xf32, #tpu.memory_space<vmem>>, vector<16x32xf32>,
    %c0_i32_8 = arith.constant 0 : i32
    %9 = arith.cmpi eq, %arg2, %c0_i32_8 : i32
    %10 = arith.extui %9 : i1 to i32
    %c0_i32_9 = arith.constant 0 : i32
    %11 = arith.cmpi ne, %10, %c0_i32_9 : i32
    scf.if %11 {
      %c0_10 = arith.constant 0 : index
      %c0_11 = arith.constant 0 : index
      %12 = vector.load %arg6[%c0_10, %c0_11] : memref<16x32xf32, #tpu.memory_space<vmem>>, vector<16x32xf32>
      %c0_12 = arith.constant 0 : index
      %c0_13 = arith.constant 0 : index
      %13 = vector.load %arg5[%c0_12, %c0_13] : memref<16x32xf32, #tpu.memory_space<vmem>>, vector<16x32xf32>
      tpu.vector_store %arg5[%c0_12, %c0_13], %12 {strides = array<i32>} : memref<16x32xf32, #tpu.memory_space<vmem>>, vector<16x32xf32>,
    } else {
    }
    return
  }
  func.func @transform_0(%arg0: i32, %arg1: i32, %arg2: i32) -> (i32, i32) {
    %c0_i32 = arith.constant 0 : i32
    return %arg0, %arg2 : i32, i32
  }
  func.func @transform_1(%arg0: i32, %arg1: i32, %arg2: i32) -> (i32, i32) {
    %c0_i32 = arith.constant 0 : i32
    return %arg2, %arg1 : i32, i32
  }
  func.func @transform_2(%arg0: i32, %arg1: i32, %arg2: i32) -> (i32, i32) {
    %c0_i32 = arith.constant 0 : i32
    return %arg0, %arg1 : i32, i32
  }
}

</mosaic_0001>

<llo_original>
// kernel: tpu_custom_call.1
$region0: #{tpu_custom_call.1}
  #allocation0 [shape = 'u32[]', space=smem, size = 0x4, offset = 0x4, fixed_abs, tag = 'smem constant byte address 0x4 - core index']
  #allocation1 [shape = 'u32[144,128]{1,0:T(1,128)}', space=vmem, size = 0x12000, scoped, tag = 'internal scratch']
  #allocation2 [shape = 'f32[16,32]{1,0:T(8,128)}', space=vmem, size = 0x2000, scoped, tag = 'scratch operand']
  %s0 = inlined_call_operand.hbm [shape: f32[16,32], index: 0, kind: input, shape index: {}]
  %s1 = inlined_call_operand.hbm [shape: f32[32,32], index: 1, kind: input, shape index: {}]
  %s2 = inlined_call_operand.hbm [shape: f32[16,32], index: 2, kind: output, shape index: {}]
  %s3 = sld [smem:[#allocation0]]
  $region34: #{tpu_custom_call.1} parent=0
    _
  %s5 = ssub.s32 1, %s3
  %s6 = scalar_select 0, %s5, %s3
  $region1: #{tpu_custom_call.1} parent=0
    #allocation3 [shape = 'u8[8192]{0}', space=vmem, size = 0x2000, scoped, tag = 'input window, operand 0, single buffered']
    #allocation4 [shape = 's32[1]{0}', space=sflag, size = 0x4, scoped, tag = 'scoped memory for tpu_custom_call.1']
    #allocation5 [shape = 's32[1]{0}', space=sflag, size = 0x4, scoped, tag = 'scoped memory for tpu_custom_call.1']
    #allocation6 [shape = 'u8[16384]{0}', space=vmem, size = 0x4000, scoped, tag = 'input window, operand 1, single buffered']
    #allocation7 [shape = 's32[1]{0}', space=sflag, size = 0x4, scoped, tag = 'scoped memory for tpu_custom_call.1']
    #allocation8 [shape = 'u8[8192]{0}', space=vmem, size = 0x2000, scoped, tag = 'output window, operand 0, single buffered']
    %7 = vsyncpa [#allocation4], 0
    %8 = vsyncpa [#allocation7], 0
    %9 = vsyncpa [#allocation5], 0
    // Predicated region
    $region2: #{tpu_custom_call.1} parent=1 // pred_check
      _
    $region3: #{tpu_custom_call.1} parent=1 // pred_check_branch
      %11 = sbr.rel (0) target = $region5
    $region4: #{tpu_custom_call.1} parent=1 // pred_region
      %s13 = ssub.s32 256, 256
      %14 = vsyncadd [#allocation4], %s13
      %s15 = sshll.u32 [#allocation3], 4
      %s16 = int_to_ptr.vmem [resolvable:$true] %s15
      %21 = dma.hbm_to_vmem [thread:$0]  %s0, 256, %s16, [#allocation4], 128, 128, 8
    $region5: #{tpu_custom_call.1} parent=1 // pred_fallthru
      _
    // Predicated region
    $region6: #{tpu_custom_call.1} parent=1 // pred_check
      _
    $region7: #{tpu_custom_call.1} parent=1 // pred_check_branch
      %23 = sbr.rel (0) target = $region9
    $region8: #{tpu_custom_call.1} parent=1 // pred_region
      %s25 = ssub.s32 512, 512
      %26 = vsyncadd [#allocation7], %s25
      %s27 = sshll.u32 [#allocation6], 4
      %s28 = int_to_ptr.vmem [resolvable:$true] %s27
      %33 = dma.hbm_to_vmem [thread:$0]  %s1, 512, %s28, [#allocation7], 128, 128, 8
    $region9: #{tpu_custom_call.1} parent=1 // pred_fallthru
      _
    // Predicated region
    $region10: #{tpu_custom_call.1} parent=1 // pred_check
      _
    $region11: #{tpu_custom_call.1} parent=1 // pred_check_branch
      %35 = sbr.rel (0) target = $region13
    $region12: #{tpu_custom_call.1} parent=1 // pred_region
      %36 = dma.done [#allocation4], 256
    $region13: #{tpu_custom_call.1} parent=1 // pred_fallthru
      _
    // Predicated region
    $region14: #{tpu_custom_call.1} parent=1 // pred_check
      _
    $region15: #{tpu_custom_call.1} parent=1 // pred_check_branch
      %38 = sbr.rel (0) target = $region17
    $region16: #{tpu_custom_call.1} parent=1 // pred_region
      %39 = dma.done [#allocation7], 512
    $region17: #{tpu_custom_call.1} parent=1 // pred_fallthru
      _
    %p40 = scmp.eq.s32.totalorder 0, 0
    // Predicated region
    $region18: #{tpu_custom_call.1} parent=1 // pred_check
      %p41 = pneg %p40
    $region19: #{tpu_custom_call.1} parent=1 // pred_check_branch
      %43 = sbr.rel (%p41) target = $region21
    $region20: #{tpu_custom_call.1} parent=1 // pred_region
      %vm44 = vcmask 261120
      %45 = vst.msk [vmem:[#allocation2] sm:$0xff] %vm44, 0.0
      %46 = vst.msk [vmem:[#allocation2 + $0x8] sm:$0xff] %vm44, 0.0
    $region21: #{tpu_custom_call.1} parent=1 // pred_fallthru
      _
    %v47 = vld [vmem:[#allocation3] sm:$0xff]
    %v48 = vld [vmem:[#allocation3 + $0x8] sm:$0xff]
    %v49 = vld [vmem:[#allocation6] sm:$0xff]
    %v50 = vld [vmem:[#allocation6 + $0x8] sm:$0xff]
    %v51 = vld [vmem:[#allocation6 + $0x10] sm:$0xff]
    %v52 = vld [vmem:[#allocation6 + $0x18] sm:$0xff]
    %v53 = vld [vmem:[#allocation2] sm:$0xff]
    %v54 = vld [vmem:[#allocation2 + $0x8] sm:$0xff]
    %vm55 = vcmask 261120
    %v57 = vsel %vm55, %v47, 0
    %v60 = vsel %vm55, %v48, 0
    %62 = vmatprep.subr.mxu0 0.0
    %63 = vmatpush1.msra.mxu0 0.0
    %64 = vmatprep.subr.mxu0 0.0
    %65 = vmatpush1.msra.mxu0 0.0
    %66 = vmatprep.subr.mxu0 0.0
    %67 = vmatpush1.msra.mxu0 0.0
    %68 = vmatprep.subr.mxu0 0.0
    %69 = vmatpush1.msra.mxu0 0.0
    %70 = vmatprep.subr.mxu0 0.0
    %71 = vmatpush1.msra.mxu0 0.0
    %72 = vmatprep.subr.mxu0 0.0
    %73 = vmatpush1.msra.mxu0 0.0
    %74 = vmatprep.subr.mxu0 0.0
    %75 = vmatpush1.msra.mxu0 0.0
    %76 = vmatprep.subr.mxu0 0.0
    %77 = vmatpush1.msra.mxu0 0.0
    %78 = vmatprep.subr.mxu0 0.0
    %79 = vmatpush1.msra.mxu0 0.0
    %80 = vmatprep.subr.mxu0 0.0
    %81 = vmatpush1.msra.mxu0 0.0
    %82 = vmatprep.subr.mxu0 0.0
    %83 = vmatpush1.msra.mxu0 0.0
    %84 = vmatprep.subr.mxu0 0.0
    %85 = vmatpush1.msra.mxu0 0.0
    %86 = vmatprep.subr.mxu0 0.0
    %87 = vmatpush1.msra.mxu0 %v52
    %88 = vmatprep.subr.mxu0 0.0
    %89 = vmatpush1.msra.mxu0 %v51
    %90 = vmatprep.subr.mxu0 0.0
    %91 = vmatpush1.msra.mxu0 %v50
    %92 = vmatprep.subr.mxu0 0.0
    %93 = vmatpush1.msra.mxu0 %v49
    %94 = vmatprep.subr.mxu0 0.0
    %95 = vmatpush2.msra.mxu0 0.0
    %96 = vmatprep.subr.mxu0 0.0
    %97 = vmatpush2.msra.mxu0 0.0
    %98 = vmatprep.subr.mxu0 0.0
    %99 = vmatpush2.msra.mxu0 0.0
    %100 = vmatprep.subr.mxu0 0.0
    %101 = vmatpush2.msra.mxu0 0.0
    %102 = vmatprep.subr.mxu0 0.0
    %103 = vmatpush2.msra.mxu0 0.0
    %104 = vmatprep.subr.mxu0 0.0
    %105 = vmatpush2.msra.mxu0 0.0
    %106 = vmatprep.subr.mxu0 0.0
    %107 = vmatpush2.msra.mxu0 0.0
    %108 = vmatprep.subr.mxu0 0.0
    %109 = vmatpush2.msra.mxu0 0.0
    %110 = vmatprep.subr.mxu0 0.0
    %111 = vmatpush2.msra.mxu0 0.0
    %112 = vmatprep.subr.mxu0 0.0
    %113 = vmatpush2.msra.mxu0 0.0
    %114 = vmatprep.subr.mxu0 0.0
    %115 = vmatpush2.msra.mxu0 0.0
    %116 = vmatprep.subr.mxu0 0.0
    %117 = vmatpush2.msra.mxu0 0.0
    %118 = vmatprep.subr.mxu0 0.0
    %119 = vmatpush2.msra.mxu0 0.0
    %120 = vmatprep.subr.mxu0 0.0
    %121 = vmatpush2.msra.mxu0 0.0
    %122 = vmatprep.subr.mxu0 0.0
    %123 = vmatpush2.msra.mxu0 0.0
    %124 = vmatprep.subr.mxu0 0.0
    %125 = vmatpush2.msra.mxu0 0.0
    %126 = vmatprep.mubr.f32.mxu0 0.0
    %127 = vmatmul.mubr.f32.gmra.mxu0 %v57
    %v128 = vpop.f32.mrf.mxu0
    %v129 = vadd.f32 0.0, %v128
    %v130 = vpop.f32.mrf.mxu0
    %131 = vmatprep.mubr.f32.mxu0 0.0
    %132 = vmatmul.mubr.f32.gmra.mxu0 %v60
    %v133 = vpop.f32.mrf.mxu0
    %v134 = vadd.f32 0.0, %v133
    %v135 = vpop.f32.mrf.mxu0
    %136 = vdwg.mxu0
    %v137 = vadd.f32 %v53, %v129
    %v138 = vadd.f32 %v54, %v134
    %139 = vst.msk [vmem:[#allocation2] sm:$0xff] %vm55, %v137
    %140 = vst.msk [vmem:[#allocation2 + $0x8] sm:$0xff] %vm55, %v138
    // Predicated region
    $region22: #{tpu_custom_call.1} parent=1 // pred_check
      %p141 = pneg %p40
    $region23: #{tpu_custom_call.1} parent=1 // pred_check_branch
      %143 = sbr.rel (%p141) target = $region25
    $region24: #{tpu_custom_call.1} parent=1 // pred_region
      %v144 = vld [vmem:[#allocation2] sm:$0xff]
      %v145 = vld [vmem:[#allocation2 + $0x8] sm:$0xff]
      %146 = vst.msk [vmem:[#allocation8] sm:$0xff] %vm55, %v144
      %147 = vst.msk [vmem:[#allocation8 + $0x8] sm:$0xff] %vm55, %v145
    $region25: #{tpu_custom_call.1} parent=1 // pred_fallthru
      _
    // Predicated region
    $region26: #{tpu_custom_call.1} parent=1 // pred_check
      _
    $region27: #{tpu_custom_call.1} parent=1 // pred_check_branch
      %149 = sbr.rel (0) target = $region29
    $region28: #{tpu_custom_call.1} parent=1 // pred_region
      %s151 = ssub.s32 256, 256
      %152 = vsyncadd [#allocation5], %s151
      %s153 = sshll.u32 [#allocation8], 4
      %s154 = int_to_ptr.vmem [resolvable:$true] %s153
      %159 = dma.vmem_to_hbm [thread:$0]  %s154, 256, %s2, [#allocation5], 128, 128, 8
    $region29: #{tpu_custom_call.1} parent=1 // pred_fallthru
      _
    // Predicated region
    $region30: #{tpu_custom_call.1} parent=1 // pred_check
      _
    $region31: #{tpu_custom_call.1} parent=1 // pred_check_branch
      %161 = sbr.rel (0) target = $region33
    $region32: #{tpu_custom_call.1} parent=1 // pred_region
      %162 = dma.done [#allocation5], 256
    $region33: #{tpu_custom_call.1} parent=1 // pred_fallthru
      _
    %163 = vsyncpa [#allocation4], 1
    %164 = vsyncpa [#allocation7], 1
    %165 = vsyncpa [#allocation5], 1

</llo_original>
